<compile_context>
chip_gen: v5e
topology: v5e:2x2
jax: 0.10.0
libtpu: 0.0.40
codegen_flags: <defaults>
</compile_context>

<pallas_src>
import jax
import jax.numpy as jnp
from jax.experimental import pallas as pl
from jax.experimental.pallas import tpu as pltpu

LANE_MULT = 256  # multiple of 128 (vreg lanes / v5e) and of 256 (v6e/v7x MXU pass width)


def _round_up(x, m):
    return ((x + m - 1) // m) * m


def actor_kernel(x_ref,
                 w1_ref, b1_ref,
                 w2_ref, b2_ref,
                 w3_ref, b3_ref,
                 w4_ref, b4_ref,
                 out_ref):
    """Transposed MLP: activations are (features, TB); TB sits on the lane axis."""
    x = x_ref[...]
    if x.dtype != jnp.bfloat16:           # skip the cast entirely for bf16 inputs
        x = x.astype(jnp.bfloat16)

    # fc1: (32, S) @ (S, TB) -> (32, TB), f32 accumulate, f32 bias/ReLU
    h = jnp.dot(w1_ref[...], x, preferred_element_type=jnp.float32) + b1_ref[...]
    h = jnp.maximum(h, 0.0).astype(jnp.bfloat16)
    # fc2: (64, 32) @ (32, TB)
    h = jnp.dot(w2_ref[...], h, preferred_element_type=jnp.float32) + b2_ref[...]
    h = jnp.maximum(h, 0.0).astype(jnp.bfloat16)
    # fc3: (64, 64) @ (64, TB)
    h = jnp.dot(w3_ref[...], h, preferred_element_type=jnp.float32) + b3_ref[...]
    h = jnp.maximum(h, 0.0).astype(jnp.bfloat16)
    # fc4 + tanh: (A, 64) @ (64, TB) -> lane-dense (A, TB) store
    h = jnp.dot(w4_ref[...], h, preferred_element_type=jnp.float32) + b4_ref[...]
    out_ref[...] = jnp.tanh(h).astype(out_ref.dtype)


def _select_tiling(B, tb_max):
    """Pick (TB, B_pad, n_steps): pad only to LANE_MULT granularity, >=2 steps for v7x."""
    tb_max = max(LANE_MULT, _round_up(tb_max, LANE_MULT))
    B_lane = _round_up(max(B, 1), LANE_MULT)
    # At least 2 grid steps when there is enough work so the "parallel" batch axis
    # actually shards across the two TensorCores on v7x.
    min_steps = 2 if B_lane >= 2 * LANE_MULT else 1
    n_steps = max(pl.cdiv(B_lane, tb_max), min_steps)
    TB = _round_up(pl.cdiv(B_lane, n_steps), LANE_MULT)
    n_steps = pl.cdiv(B_lane, TB)
    B_pad = n_steps * TB
    return TB, B_pad, n_steps


def actor_forward(state, params, *, tb_max=8192):
    """state: (B, state_size) f32 (or bf16); params from init_actor_params."""
    B, state_size = state.shape
    action_size = params["w4t"].shape[0]

    TB, B_pad, n_steps = _select_tiling(B, tb_max)
    if B_pad != B:
        state = jnp.pad(state, ((0, B_pad - B), (0, 0)))
    x_t = state.T                                    # (state_size, B_pad): batch on lanes

    weights = (params["w1t"], params["b1"],
               params["w2t"], params["b2"],
               params["w3t"], params["b3"],
               params["w4t"], params["b4"])

    # Weights/biases: full-array blocks, constant index_map -> DMA'd once, VMEM-resident.
    resident = lambda a: pl.BlockSpec(a.shape, lambda i: (0, 0))
    in_specs = [pl.BlockSpec((state_size, TB), lambda i: (0, i))]
    in_specs += [resident(a) for a in weights]

    flops = 2 * B_pad * (state_size * 32 + 32 * 64 + 64 * 64 + 64 * action_size)
    weight_bytes = sum(int(a.size) * a.dtype.itemsize for a in weights)
    bytes_accessed = (int(x_t.size) * x_t.dtype.itemsize
                      + B_pad * action_size * 4 + weight_bytes)

    out_t = pl.pallas_call(
        actor_kernel,
        out_shape=jax.ShapeDtypeStruct((action_size, B_pad), jnp.float32),
        grid=(n_steps,),
        in_specs=in_specs,
        out_specs=pl.BlockSpec((action_size, TB), lambda i: (0, i)),
        compiler_params=pltpu.CompilerParams(
            dimension_semantics=("parallel",),
            vmem_limit_bytes=48 * 1024 * 1024),
        cost_estimate=pl.CostEstimate(
            flops=int(flops),
            transcendentals=int(B_pad * action_size),
            bytes_accessed=int(bytes_accessed)),
    )(x_t, *weights)

    return out_t[:, :B].T                            # back to (B, action_size)


def init_actor_params(key, state_size, action_size):
    """nn.Linear-style init: U(-1/sqrt(fan_in), 1/sqrt(fan_in)) for weights and biases.

    Weights stored transposed (out_features, in_features) in bf16 (MXU-native);
    biases stored as (out_features, 1) columns in f32 for lane-broadcast.
    """
    sizes = [(state_size, 32), (32, 64), (64, 64), (64, action_size)]
    params = {}
    keys = jax.random.split(key, 2 * len(sizes))
    for i, (fan_in, fan_out) in enumerate(sizes):
        bound = float(fan_in) ** -0.5
        w = jax.random.uniform(keys[2 * i], (fan_in, fan_out), jnp.float32,
                               minval=-bound, maxval=bound)
        b = jax.random.uniform(keys[2 * i + 1], (fan_out,), jnp.float32,
                               minval=-bound, maxval=bound)
        params[f"w{i + 1}t"] = w.T.astype(jnp.bfloat16)     # (fan_out, fan_in)
        params[f"b{i + 1}"] = b.reshape(fan_out, 1)          # (fan_out, 1) f32
    return params


def actor_reference(state, params):
    """Pure-JAX reference mirroring the kernel's dtype placement (bf16 matmul inputs,
    f32 accumulation / elementwise)."""
    def layer(x, wt, b, act):
        y = jnp.dot(x.astype(jnp.bfloat16), wt.T,
                    preferred_element_type=jnp.float32) + b[:, 0]
        return act(y)

    relu = lambda v: jnp.maximum(v, 0.0)
    x = layer(state, params["w1t"], params["b1"], relu)
    x = layer(x, params["w2t"], params["b2"], relu)
    x = layer(x, params["w3t"], params["b3"], relu)
    return layer(x, params["w4t"], params["b4"], jnp.tanh)


if __name__ == "__main__":
    key = jax.random.PRNGKey(0)
    k_params, k_state = jax.random.split(key)

    batch = 100          # non-multiple of 8 -> exercises lane-padding + slicing back
    state_size = 16
    action_size = 4

    params = init_actor_params(k_params, state_size, action_size)
    state = jax.random.normal(k_state, (batch, state_size), dtype=jnp.float32)

    out = jax.block_until_ready(actor_forward(state, params))
    ref = actor_reference(state, params)
    assert out.shape == (batch, action_size)
    assert jnp.allclose(out, ref, atol=2e-3, rtol=2e-3), \
        float(jnp.max(jnp.abs(out - ref)))

    # Extra check: force a multi-step grid (grid=(4,), TB=256) + bounded padding.
    batch2 = 777
    state2 = jax.random.normal(jax.random.PRNGKey(1), (batch2, state_size),
                               dtype=jnp.float32)
    out2 = jax.block_until_ready(actor_forward(state2, params, tb_max=256))
    ref2 = actor_reference(state2, params)
    assert out2.shape == (batch2, action_size)
    assert jnp.allclose(out2, ref2, atol=2e-3, rtol=2e-3), \
        float(jnp.max(jnp.abs(out2 - ref2)))

    print("KERNEL_OK")
</pallas_src>

<mosaic_0001>
module attributes {stable_mosaic.version = 11 : i64} {
  func.func @actor_kernel(%arg0: i32, %arg1: memref<16x256xf32, #tpu.memory_space<vmem>>, %arg2: memref<32x16xbf16, #tpu.memory_space<vmem>>, %arg3: memref<32x1xf32, #tpu.memory_space<vmem>>, %arg4: memref<64x32xbf16, #tpu.memory_space<vmem>>, %arg5: memref<64x1xf32, #tpu.memory_space<vmem>>, %arg6: memref<64x64xbf16, #tpu.memory_space<vmem>>, %arg7: memref<64x1xf32, #tpu.memory_space<vmem>>, %arg8: memref<4x64xbf16, #tpu.memory_space<vmem>>, %arg9: memref<4x1xf32, #tpu.memory_space<vmem>>, %arg10: memref<4x256xf32, #tpu.memory_space<vmem>>) attributes {dimension_semantics = [#tpu.dimension_semantics<parallel>], iteration_bounds = array<i64: 1>, scalar_prefetch = 0 : i64, scratch_operands = 0 : i64, tpu.core_type = #tpu.core_type<tc>, window_params = [{transform_indices = @transform_0, window_bounds = array<i64: 16, 256>}, {pipeline_mode = #tpu.pipeline_mode<synchronous>, transform_indices = @transform_1, window_bounds = array<i64: 32, 16>}, {pipeline_mode = #tpu.pipeline_mode<synchronous>, transform_indices = @transform_2, window_bounds = array<i64: 32, 1>}, {pipeline_mode = #tpu.pipeline_mode<synchronous>, transform_indices = @transform_3, window_bounds = array<i64: 64, 32>}, {pipeline_mode = #tpu.pipeline_mode<synchronous>, transform_indices = @transform_4, window_bounds = array<i64: 64, 1>}, {pipeline_mode = #tpu.pipeline_mode<synchronous>, transform_indices = @transform_5, window_bounds = array<i64: 64, 64>}, {pipeline_mode = #tpu.pipeline_mode<synchronous>, transform_indices = @transform_6, window_bounds = array<i64: 64, 1>}, {pipeline_mode = #tpu.pipeline_mode<synchronous>, transform_indices = @transform_7, window_bounds = array<i64: 4, 64>}, {pipeline_mode = #tpu.pipeline_mode<synchronous>, transform_indices = @transform_8, window_bounds = array<i64: 4, 1>}, {transform_indices = @transform_9, window_bounds = array<i64: 4, 256>}]} {
    %c0 = arith.constant 0 : index
    %c0_0 = arith.constant 0 : index
    %0 = vector.load %arg1[%c0, %c0_0] : memref<16x256xf32, #tpu.memory_space<vmem>>, vector<16x256xf32>
    %1 = arith.truncf %0 : vector<16x256xf32> to vector<16x256xbf16>
    %c0_1 = arith.constant 0 : index
    %c0_2 = arith.constant 0 : index
    %2 = vector.load %arg2[%c0_1, %c0_2] : memref<32x16xbf16, #tpu.memory_space<vmem>>, vector<32x16xbf16>
    %cst = arith.constant dense<0.000000e+00> : vector<32x256xf32>
    %3 = tpu.matmul %2, %1, %cst {dimension_numbers = #tpu.dot_dimension_numbers<[1], [0], [0], [1], [0, 0, 1, 1], [], []>} : vector<32x16xbf16>, vector<16x256xbf16>, vector<32x256xf32> -> vector<32x256xf32>
    %c0_3 = arith.constant 0 : index
    %c0_4 = arith.constant 0 : index
    %4 = vector.load %arg3[%c0_3, %c0_4] : memref<32x1xf32, #tpu.memory_space<vmem>>, vector<32x1xf32>
    %5 = vector.broadcast %4 : vector<32x1xf32> to vector<32x256xf32>
    %6 = arith.addf %3, %5 : vector<32x256xf32>
    %cst_5 = arith.constant 0.000000e+00 : f32
    %7 = vector.broadcast %cst_5 : f32 to vector<32x256xf32>
    %8 = arith.maximumf %6, %7 : vector<32x256xf32>
    %9 = arith.truncf %8 : vector<32x256xf32> to vector<32x256xbf16>
    %c0_6 = arith.constant 0 : index
    %c0_7 = arith.constant 0 : index
    %10 = vector.load %arg4[%c0_6, %c0_7] : memref<64x32xbf16, #tpu.memory_space<vmem>>, vector<64x32xbf16>
    %cst_8 = arith.constant dense<0.000000e+00> : vector<64x256xf32>
    %11 = tpu.matmul %10, %9, %cst_8 {dimension_numbers = #tpu.dot_dimension_numbers<[1], [0], [0], [1], [0, 0, 1, 1], [], []>} : vector<64x32xbf16>, vector<32x256xbf16>, vector<64x256xf32> -> vector<64x256xf32>
    %c0_9 = arith.constant 0 : index
    %c0_10 = arith.constant 0 : index
    %12 = vector.load %arg5[%c0_9, %c0_10] : memref<64x1xf32, #tpu.memory_space<vmem>>, vector<64x1xf32>
    %13 = vector.broadcast %12 : vector<64x1xf32> to vector<64x256xf32>
    %14 = arith.addf %11, %13 : vector<64x256xf32>
    %cst_11 = arith.constant 0.000000e+00 : f32
    %15 = vector.broadcast %cst_11 : f32 to vector<64x256xf32>
    %16 = arith.maximumf %14, %15 : vector<64x256xf32>
    %17 = arith.truncf %16 : vector<64x256xf32> to vector<64x256xbf16>
    %c0_12 = arith.constant 0 : index
    %c0_13 = arith.constant 0 : index
    %18 = vector.load %arg6[%c0_12, %c0_13] : memref<64x64xbf16, #tpu.memory_space<vmem>>, vector<64x64xbf16>
    %cst_14 = arith.constant dense<0.000000e+00> : vector<64x256xf32>
    %19 = tpu.matmul %18, %17, %cst_14 {dimension_numbers = #tpu.dot_dimension_numbers<[1], [0], [0], [1], [0, 0, 1, 1], [], []>} : vector<64x64xbf16>, vector<64x256xbf16>, vector<64x256xf32> -> vector<64x256xf32>
    %c0_15 = arith.constant 0 : index
    %c0_16 = arith.constant 0 : index
    %20 = vector.load %arg7[%c0_15, %c0_16] : memref<64x1xf32, #tpu.memory_space<vmem>>, vector<64x1xf32>
    %21 = vector.broadcast %20 : vector<64x1xf32> to vector<64x256xf32>
    %22 = arith.addf %19, %21 : vector<64x256xf32>
    %cst_17 = arith.constant 0.000000e+00 : f32
    %23 = vector.broadcast %cst_17 : f32 to vector<64x256xf32>
    %24 = arith.maximumf %22, %23 : vector<64x256xf32>
    %25 = arith.truncf %24 : vector<64x256xf32> to vector<64x256xbf16>
    %c0_18 = arith.constant 0 : index
    %c0_19 = arith.constant 0 : index
    %26 = vector.load %arg8[%c0_18, %c0_19] : memref<4x64xbf16, #tpu.memory_space<vmem>>, vector<4x64xbf16>
    %cst_20 = arith.constant dense<0.000000e+00> : vector<4x256xf32>
    %27 = tpu.matmul %26, %25, %cst_20 {dimension_numbers = #tpu.dot_dimension_numbers<[1], [0], [0], [1], [0, 0, 1, 1], [], []>} : vector<4x64xbf16>, vector<64x256xbf16>, vector<4x256xf32> -> vector<4x256xf32>
    %c0_21 = arith.constant 0 : index
    %c0_22 = arith.constant 0 : index
    %28 = vector.load %arg9[%c0_21, %c0_22] : memref<4x1xf32, #tpu.memory_space<vmem>>, vector<4x1xf32>
    %29 = vector.broadcast %28 : vector<4x1xf32> to vector<4x256xf32>
    %30 = arith.addf %27, %29 : vector<4x256xf32>
    %31 = math.tanh %30 : vector<4x256xf32>
    %c0_23 = arith.constant 0 : index
    %c0_24 = arith.constant 0 : index
    %32 = vector.load %arg10[%c0_23, %c0_24] : memref<4x256xf32, #tpu.memory_space<vmem>>, vector<4x256xf32>
    tpu.vector_store %arg10[%c0_23, %c0_24], %31 {strides = array<i32>} : memref<4x256xf32, #tpu.memory_space<vmem>>, vector<4x256xf32>,
    return
  }
  func.func @transform_0(%arg0: i32) -> (i32, i32) {
    %c0_i32 = arith.constant 0 : i32
    %c0_i32_0 = arith.constant 0 : i32
    return %c0_i32, %arg0 : i32, i32
  }
  func.func @transform_1(%arg0: i32) -> (i32, i32) {
    %c0_i32 = arith.constant 0 : i32
    %c0_i32_0 = arith.constant 0 : i32
    %c0_i32_1 = arith.constant 0 : i32
    return %c0_i32, %c0_i32_0 : i32, i32
  }
  func.func @transform_2(%arg0: i32) -> (i32, i32) {
    %c0_i32 = arith.constant 0 : i32
    %c0_i32_0 = arith.constant 0 : i32
    %c0_i32_1 = arith.constant 0 : i32
    return %c0_i32, %c0_i32_0 : i32, i32
  }
  func.func @transform_3(%arg0: i32) -> (i32, i32) {
    %c0_i32 = arith.constant 0 : i32
    %c0_i32_0 = arith.constant 0 : i32
    %c0_i32_1 = arith.constant 0 : i32
    return %c0_i32, %c0_i32_0 : i32, i32
  }
  func.func @transform_4(%arg0: i32) -> (i32, i32) {
    %c0_i32 = arith.constant 0 : i32
    %c0_i32_0 = arith.constant 0 : i32
    %c0_i32_1 = arith.constant 0 : i32
    return %c0_i32, %c0_i32_0 : i32, i32
  }
  func.func @transform_5(%arg0: i32) -> (i32, i32) {
    %c0_i32 = arith.constant 0 : i32
    %c0_i32_0 = arith.constant 0 : i32
    %c0_i32_1 = arith.constant 0 : i32
    return %c0_i32, %c0_i32_0 : i32, i32
  }
  func.func @transform_6(%arg0: i32) -> (i32, i32) {
    %c0_i32 = arith.constant 0 : i32
    %c0_i32_0 = arith.constant 0 : i32
    %c0_i32_1 = arith.constant 0 : i32
    return %c0_i32, %c0_i32_0 : i32, i32
  }
  func.func @transform_7(%arg0: i32) -> (i32, i32) {
    %c0_i32 = arith.constant 0 : i32
    %c0_i32_0 = arith.constant 0 : i32
    %c0_i32_1 = arith.constant 0 : i32
    return %c0_i32, %c0_i32_0 : i32, i32
  }
  func.func @transform_8(%arg0: i32) -> (i32, i32) {
    %c0_i32 = arith.constant 0 : i32
    %c0_i32_0 = arith.constant 0 : i32
    %c0_i32_1 = arith.constant 0 : i32
    return %c0_i32, %c0_i32_0 : i32, i32
  }
  func.func @transform_9(%arg0: i32) -> (i32, i32) {
    %c0_i32 = arith.constant 0 : i32
    %c0_i32_0 = arith.constant 0 : i32
    return %c0_i32, %arg0 : i32, i32
  }
}

</mosaic_0001>

<llo_original>
// kernel: tpu_custom_call.1
$region0: #{tpu_custom_call.1}
  #allocation0 [shape = 'u32[]', space=smem, size = 0x4, offset = 0x4, fixed_abs, tag = 'smem constant byte address 0x4 - core index']
  #allocation1 [shape = 'u32[72,128]{1,0:T(1,128)}', space=vmem, size = 0x9000, scoped, tag = 'internal scratch']
  %s0 = inlined_call_operand.vmem [shape: f32[16,256], index: 0, kind: input, shape index: {}]
  %s1 = inlined_call_operand.vmem [shape: bf16[32,16], index: 1, kind: input, shape index: {}]
  %s2 = inlined_call_operand.vmem [shape: f32[32,1], index: 2, kind: input, shape index: {}]
  %s3 = inlined_call_operand.vmem [shape: bf16[64,32], index: 3, kind: input, shape index: {}]
  %s4 = inlined_call_operand.vmem [shape: f32[64,1], index: 4, kind: input, shape index: {}]
  %s5 = inlined_call_operand.vmem [shape: bf16[64,64], index: 5, kind: input, shape index: {}]
  %s6 = inlined_call_operand.vmem [shape: f32[64,1], index: 6, kind: input, shape index: {}]
  %s7 = inlined_call_operand.vmem [shape: bf16[4,64], index: 7, kind: input, shape index: {}]
  %s8 = inlined_call_operand.vmem [shape: f32[4,1], index: 8, kind: input, shape index: {}]
  %s9 = inlined_call_operand.hbm [shape: f32[4,256], index: 9, kind: output, shape index: {}]
  %s10 = sld [smem:[#allocation0]]
  $region46: #{tpu_custom_call.1} parent=0
    _
  %s12 = ssub.s32 1, %s10
  %s13 = scalar_select 0, %s12, %s10
  $region1: #{tpu_custom_call.1} parent=0
    #allocation2 [shape = 'u8[4096]{0}', space=vmem, size = 0x1000, scoped, tag = 'output window, operand 0, single buffered']
    #allocation3 [shape = 's32[1]{0}', space=sflag, size = 0x4, scoped, tag = 'scoped memory for tpu_custom_call.1']
    %14 = vsyncpa [#allocation3], 0
    // Predicated region
    $region2: #{tpu_custom_call.1} parent=1 // pred_check
      _
    $region3: #{tpu_custom_call.1} parent=1 // pred_check_branch
      %16 = sbr.rel (0) target = $region5
    $region4: #{tpu_custom_call.1} parent=1 // pred_region
      _
    $region5: #{tpu_custom_call.1} parent=1 // pred_fallthru
      _
    // Predicated region
    $region6: #{tpu_custom_call.1} parent=1 // pred_check
      _
    $region7: #{tpu_custom_call.1} parent=1 // pred_check_branch
      %18 = sbr.rel (0) target = $region9
    $region8: #{tpu_custom_call.1} parent=1 // pred_region
      _
    $region9: #{tpu_custom_call.1} parent=1 // pred_fallthru
      _
    // Predicated region
    $region10: #{tpu_custom_call.1} parent=1 // pred_check
      _
    $region11: #{tpu_custom_call.1} parent=1 // pred_check_branch
      %20 = sbr.rel (0) target = $region13
    $region12: #{tpu_custom_call.1} parent=1 // pred_region
      _
    $region13: #{tpu_custom_call.1} parent=1 // pred_fallthru
      _
    // Predicated region
    $region14: #{tpu_custom_call.1} parent=1 // pred_check
      _
    $region15: #{tpu_custom_call.1} parent=1 // pred_check_branch
      %22 = sbr.rel (0) target = $region17
    $region16: #{tpu_custom_call.1} parent=1 // pred_region
      _
    $region17: #{tpu_custom_call.1} parent=1 // pred_fallthru
      _
    // Predicated region
    $region18: #{tpu_custom_call.1} parent=1 // pred_check
      _
    $region19: #{tpu_custom_call.1} parent=1 // pred_check_branch
      %24 = sbr.rel (0) target = $region21
    $region20: #{tpu_custom_call.1} parent=1 // pred_region
      _
    $region21: #{tpu_custom_call.1} parent=1 // pred_fallthru
      _
    // Predicated region
    $region22: #{tpu_custom_call.1} parent=1 // pred_check
      _
    $region23: #{tpu_custom_call.1} parent=1 // pred_check_branch
      %26 = sbr.rel (0) target = $region25
    $region24: #{tpu_custom_call.1} parent=1 // pred_region
      _
    $region25: #{tpu_custom_call.1} parent=1 // pred_fallthru
      _
    // Predicated region
    $region26: #{tpu_custom_call.1} parent=1 // pred_check
      _
    $region27: #{tpu_custom_call.1} parent=1 // pred_check_branch
      %28 = sbr.rel (0) target = $region29
    $region28: #{tpu_custom_call.1} parent=1 // pred_region
      _
    $region29: #{tpu_custom_call.1} parent=1 // pred_fallthru
      _
    // Predicated region
    $region30: #{tpu_custom_call.1} parent=1 // pred_check
      _
    $region31: #{tpu_custom_call.1} parent=1 // pred_check_branch
      %30 = sbr.rel (0) target = $region33
    $region32: #{tpu_custom_call.1} parent=1 // pred_region
      _
    $region33: #{tpu_custom_call.1} parent=1 // pred_fallthru
      _
    // Predicated region
    $region34: #{tpu_custom_call.1} parent=1 // pred_check
      _
    $region35: #{tpu_custom_call.1} parent=1 // pred_check_branch
      %32 = sbr.rel (0) target = $region37
    $region36: #{tpu_custom_call.1} parent=1 // pred_region
      _
    $region37: #{tpu_custom_call.1} parent=1 // pred_fallthru
      _
    %v34 = vld [vmem:[%s0] sm:$0xff]
    %v35 = vld [vmem:[%s0 + $0x8] sm:$0xff]
    %v36 = vld [vmem:[%s0 + $0x10] sm:$0xff]
    %v37 = vld [vmem:[%s0 + $0x18] sm:$0xff]
    %v38 = vpack.c.bf16 %v36, %v34
    %v39 = vpack.c.bf16 %v37, %v35
    %v40 = vld [vmem:[%s1] sm:$0xf]
    %v41 = vld [vmem:[%s1 + $0x4] sm:$0xf]
    %v42 = vld [vmem:[%s1 + $0x8] sm:$0xf]
    %v43 = vld [vmem:[%s1 + $0xc] sm:$0xf]
    %v44 = vld [vmem:[%s2] sm:$0xff]
    %v45 = vld [vmem:[%s2 + $0x8] sm:$0xff]
    %v46 = vld [vmem:[%s2 + $0x10] sm:$0xff]
    %v47 = vld [vmem:[%s2 + $0x18] sm:$0xff]
    %49 = vset.pattern.permute.xlu0 0
    %50 = vperm.xlu0 %49, %v44
    %v51 = vpop.permute.xlu0 %50
    %54 = vset.pattern.permute.xlu0 0
    %55 = vperm.xlu0 %54, %v45
    %v56 = vpop.permute.xlu0 %55
    %59 = vset.pattern.permute.xlu0 0
    %60 = vperm.xlu0 %59, %v46
    %v61 = vpop.permute.xlu0 %60
    %64 = vset.pattern.permute.xlu0 0
    %65 = vperm.xlu0 %64, %v47
    %v66 = vpop.permute.xlu0 %65
    %v72 = vunpack.c.l.b16 %v40
    %v73 = vunpack.c.l.b16 %v41
    %v74 = vunpack.c.l.b16 %v42
    %v75 = vunpack.c.l.b16 %v43
    %v76 = vpack.c.b16 %v73, %v72
    %v77 = vpack.c.b16 %v75, %v74
    %vm78 = vcmask 130048
    %v80 = vsel %vm78, %v76, 0
    %v83 = vsel %vm78, %v77, 0
    %85 = vmatpush.bf16.msra.mxu0 0
    %86 = vmatpush.bf16.msra.mxu0 0
    %87 = vmatpush.bf16.msra.mxu0 0
    %88 = vmatpush.bf16.msra.mxu0 0
    %89 = vmatpush.bf16.msra.mxu0 0
    %90 = vmatpush.bf16.msra.mxu0 0
    %91 = vmatpush.bf16.msra.mxu0 0
    %92 = vmatpush.bf16.msra.mxu0 %v38
    %93 = vmatmul.bf16.gmra.mxu0 %v80
    %v94 = vpop.f32.mrf.mxu0
    %v95 = vadd.f32 %v51, %v94
    %v96 = vpop.f32.mrf.mxu0
    %v97 = vadd.f32 %v56, %v96
    %98 = vmatmul.bf16.gmra.mxu0 %v83
    %v99 = vpop.f32.mrf.mxu0
    %v100 = vadd.f32 %v61, %v99
    %v101 = vpop.f32.mrf.mxu0
    %v102 = vadd.f32 %v66, %v101
    %103 = vdwg.mxu0
    %104 = vmatpush.bf16.msra.mxu0 0
    %105 = vmatpush.bf16.msra.mxu0 0
    %106 = vmatpush.bf16.msra.mxu0 0
    %107 = vmatpush.bf16.msra.mxu0 0
    %108 = vmatpush.bf16.msra.mxu0 0
    %109 = vmatpush.bf16.msra.mxu0 0
    %110 = vmatpush.bf16.msra.mxu0 0
    %111 = vmatpush.bf16.msra.mxu0 %v39
    %112 = vmatmul.bf16.gmra.mxu0 %v80
    %v113 = vpop.f32.mrf.mxu0
    %v114 = vadd.f32 %v51, %v113
    %v115 = vpop.f32.mrf.mxu0
    %v116 = vadd.f32 %v56, %v115
    %117 = vmatmul.bf16.gmra.mxu0 %v83
    %v118 = vpop.f32.mrf.mxu0
    %v119 = vadd.f32 %v61, %v118
    %v120 = vpop.f32.mrf.mxu0
    %v121 = vadd.f32 %v66, %v120
    %122 = vdwg.mxu0
    %v123 = vmax.f32 %v95, 0.0
    %v124 = vmax.f32 %v114, 0.0
    %v125 = vmax.f32 %v97, 0.0
    %v126 = vmax.f32 %v116, 0.0
    %v127 = vmax.f32 %v100, 0.0
    %v128 = vmax.f32 %v119, 0.0
    %v129 = vmax.f32 %v102, 0.0
    %v130 = vmax.f32 %v121, 0.0
    %v131 = vpack.c.bf16 %v125, %v123
    %v132 = vpack.c.bf16 %v126, %v124
    %v133 = vpack.c.bf16 %v129, %v127
    %v134 = vpack.c.bf16 %v130, %v128
    %v135 = vld [vmem:[%s3] sm:$0xf]
    %v136 = vld [vmem:[%s3 + $0x4] sm:$0xf]
    %v137 = vld [vmem:[%s3 + $0x8] sm:$0xf]
    %v138 = vld [vmem:[%s3 + $0xc] sm:$0xf]
    %v139 = vld [vmem:[%s3 + $0x10] sm:$0xf]
    %v140 = vld [vmem:[%s3 + $0x14] sm:$0xf]
    %v141 = vld [vmem:[%s3 + $0x18] sm:$0xf]
    %v142 = vld [vmem:[%s3 + $0x1c] sm:$0xf]
    %v143 = vld [vmem:[%s4] sm:$0xff]
    %v144 = vld [vmem:[%s4 + $0x8] sm:$0xff]
    %v145 = vld [vmem:[%s4 + $0x10] sm:$0xff]
    %v146 = vld [vmem:[%s4 + $0x18] sm:$0xff]
    %v147 = vld [vmem:[%s4 + $0x20] sm:$0xff]
    %v148 = vld [vmem:[%s4 + $0x28] sm:$0xff]
    %v149 = vld [vmem:[%s4 + $0x30] sm:$0xff]
    %v150 = vld [vmem:[%s4 + $0x38] sm:$0xff]
    %152 = vset.pattern.permute.xlu0 0
    %153 = vperm.xlu0 %152, %v143
    %v154 = vpop.permute.xlu0 %153
    %157 = vset.pattern.permute.xlu0 0
    %158 = vperm.xlu0 %157, %v144
    %v159 = vpop.permute.xlu0 %158
    %162 = vset.pattern.permute.xlu0 0
    %163 = vperm.xlu0 %162, %v145
    %v164 = vpop.permute.xlu0 %163
    %167 = vset.pattern.permute.xlu0 0
    %168 = vperm.xlu0 %167, %v146
    %v169 = vpop.permute.xlu0 %168
    %172 = vset.pattern.permute.xlu0 0
    %173 = vperm.xlu0 %172, %v147
    %v174 = vpop.permute.xlu0 %173
    %177 = vset.pattern.permute.xlu0 0
    %178 = vperm.xlu0 %177, %v148
    %v179 = vpop.permute.xlu0 %178
    %182 = vset.pattern.permute.xlu0 0
    %183 = vperm.xlu0 %182, %v149
    %v184 = vpop.permute.xlu0 %183
    %187 = vset.pattern.permute.xlu0 0
    %188 = vperm.xlu0 %187, %v150
    %v189 = vpop.permute.xlu0 %188
    %v199 = vunpack.c.l.b16 %v135
    %v200 = vunpack.c.l.b16 %v136
    %v201 = vunpack.c.l.b16 %v137
    %v202 = vunpack.c.l.b16 %v138
    %v203 = vunpack.c.l.b16 %v139
    %v204 = vunpack.c.l.b16 %v140
    %v205 = vunpack.c.l.b16 %v141
    %v206 = vunpack.c.l.b16 %v142
    %v207 = vpack.c.b16 %v200, %v199
    %v208 = vpack.c.b16 %v202, %v201
    %v209 = vpack.c.b16 %v204, %v203
    %v210 = vpack.c.b16 %v206, %v205
    %vm211 = vcmask 261120
    %v213 = vsel %vm211, %v207, 0
    %v216 = vsel %vm211, %v208, 0
    %v219 = vsel %vm211, %v209, 0
    %v222 = vsel %vm211, %v210, 0
    %224 = vmatpush.bf16.msra.mxu0 0
    %225 = vmatpush.bf16.msra.mxu0 0
    %226 = vmatpush.bf16.msra.mxu0 0
    %227 = vmatpush.bf16.msra.mxu0 0
    %228 = vmatpush.bf16.msra.mxu0 0
    %229 = vmatpush.bf16.msra.mxu0 0
    %230 = vmatpush.bf16.msra.mxu0 %v133
    %231 = vmatpush.bf16.msra.mxu0 %v131
    %232 = vmatmul.bf16.gmra.mxu0 %v213
    %v233 = vpop.f32.mrf.mxu0
    %v234 = vadd.f32 %v154, %v233
    %v235 = vpop.f32.mrf.mxu0
    %v236 = vadd.f32 %v159, %v235
    %237 = vmatmul.bf16.gmra.mxu0 %v216
    %v238 = vpop.f32.mrf.mxu0
    %v239 = vadd.f32 %v164, %v238
    %v240 = vpop.f32.mrf.mxu0
    %v241 = vadd.f32 %v169, %v240
    %242 = vmatmul.bf16.gmra.mxu0 %v219
    %v243 = vpop.f32.mrf.mxu0
    %v244 = vadd.f32 %v174, %v243
    %v245 = vpop.f32.mrf.mxu0
    %v246 = vadd.f32 %v179, %v245
    %247 = vmatmul.bf16.gmra.mxu0 %v222
    %v248 = vpop.f32.mrf.mxu0
    %v249 = vadd.f32 %v184, %v248
    %v250 = vpop.f32.mrf.mxu0
    %v251 = vadd.f32 %v189, %v250
    %252 = vdwg.mxu0
    %253 = vmatpush.bf16.msra.mxu0 0
    %254 = vmatpush.bf16.msra.mxu0 0
    %255 = vmatpush.bf16.msra.mxu0 0
    %256 = vmatpush.bf16.msra.mxu0 0
    %257 = vmatpush.bf16.msra.mxu0 0
    %258 = vmatpush.bf16.msra.mxu0 0
    %259 = vmatpush.bf16.msra.mxu0 %v134
    %260 = vmatpush.bf16.msra.mxu0 %v132
    %261 = vmatmul.bf16.gmra.mxu0 %v213
    %v262 = vpop.f32.mrf.mxu0
    %v263 = vadd.f32 %v154, %v262
    %v264 = vpop.f32.mrf.mxu0
    %v265 = vadd.f32 %v159, %v264
    %266 = vmatmul.bf16.gmra.mxu0 %v216
    %v267 = vpop.f32.mrf.mxu0
    %v268 = vadd.f32 %v164, %v267
    %v269 = vpop.f32.mrf.mxu0
    %v270 = vadd.f32 %v169, %v269
    %271 = vmatmul.bf16.gmra.mxu0 %v219
    %v272 = vpop.f32.mrf.mxu0
    %v273 = vadd.f32 %v174, %v272
    %v274 = vpop.f32.mrf.mxu0
    %v275 = vadd.f32 %v179, %v274
    %276 = vmatmul.bf16.gmra.mxu0 %v222
    %v277 = vpop.f32.mrf.mxu0
    %v278 = vadd.f32 %v184, %v277
    %v279 = vpop.f32.mrf.mxu0
    %v280 = vadd.f32 %v189, %v279
    %281 = vdwg.mxu0
    %v282 = vmax.f32 %v234, 0.0
    %v283 = vmax.f32 %v263, 0.0
    %v284 = vmax.f32 %v236, 0.0
    %v285 = vmax.f32 %v265, 0.0
    %v286 = vmax.f32 %v239, 0.0
    %v287 = vmax.f32 %v268, 0.0
    %v288 = vmax.f32 %v241, 0.0
    %v289 = vmax.f32 %v270, 0.0
    %v290 = vmax.f32 %v244, 0.0
    %v291 = vmax.f32 %v273, 0.0
    %v292 = vmax.f32 %v246, 0.0
    %v293 = vmax.f32 %v275, 0.0
    %v294 = vmax.f32 %v249, 0.0
    %v295 = vmax.f32 %v278, 0.0
    %v296 = vmax.f32 %v251, 0.0
    %v297 = vmax.f32 %v280, 0.0
    %v298 = vpack.c.bf16 %v284, %v282
    %v299 = vpack.c.bf16 %v285, %v283
    %v300 = vpack.c.bf16 %v288, %v286
    %v301 = vpack.c.bf16 %v289, %v287
    %v302 = vpack.c.bf16 %v292, %v290
    %v303 = vpack.c.bf16 %v293, %v291
    %v304 = vpack.c.bf16 %v296, %v294
    %v305 = vpack.c.bf16 %v297, %v295
    %v306 = vld [vmem:[%s5] sm:$0xf]
    %v307 = vld [vmem:[%s5 + $0x4] sm:$0xf]
    %v308 = vld [vmem:[%s5 + $0x8] sm:$0xf]
    %v309 = vld [vmem:[%s5 + $0xc] sm:$0xf]
    %v310 = vld [vmem:[%s5 + $0x10] sm:$0xf]
    %v311 = vld [vmem:[%s5 + $0x14] sm:$0xf]
    %v312 = vld [vmem:[%s5 + $0x18] sm:$0xf]
    %v313 = vld [vmem:[%s5 + $0x1c] sm:$0xf]
    %v314 = vld [vmem:[%s6] sm:$0xff]
    %v315 = vld [vmem:[%s6 + $0x8] sm:$0xff]
    %v316 = vld [vmem:[%s6 + $0x10] sm:$0xff]
    %v317 = vld [vmem:[%s6 + $0x18] sm:$0xff]
    %v318 = vld [vmem:[%s6 + $0x20] sm:$0xff]
    %v319 = vld [vmem:[%s6 + $0x28] sm:$0xff]
    %v320 = vld [vmem:[%s6 + $0x30] sm:$0xff]
    %v321 = vld [vmem:[%s6 + $0x38] sm:$0xff]
    %323 = vset.pattern.permute.xlu0 0
    %324 = vperm.xlu0 %323, %v314
    %v325 = vpop.permute.xlu0 %324
    %328 = vset.pattern.permute.xlu0 0
    %329 = vperm.xlu0 %328, %v315
    %v330 = vpop.permute.xlu0 %329
    %333 = vset.pattern.permute.xlu0 0
    %334 = vperm.xlu0 %333, %v316
    %v335 = vpop.permute.xlu0 %334
    %338 = vset.pattern.permute.xlu0 0
    %339 = vperm.xlu0 %338, %v317
    %v340 = vpop.permute.xlu0 %339
    %343 = vset.pattern.permute.xlu0 0
    %344 = vperm.xlu0 %343, %v318
    %v345 = vpop.permute.xlu0 %344
    %348 = vset.pattern.permute.xlu0 0
    %349 = vperm.xlu0 %348, %v319
    %v350 = vpop.permute.xlu0 %349
    %353 = vset.pattern.permute.xlu0 0
    %354 = vperm.xlu0 %353, %v320
    %v355 = vpop.permute.xlu0 %354
    %358 = vset.pattern.permute.xlu0 0
    %359 = vperm.xlu0 %358, %v321
    %v360 = vpop.permute.xlu0 %359
    %v370 = vunpack.c.l.b16 %v306
    %v371 = vunpack.c.l.b16 %v307
    %v372 = vunpack.c.l.b16 %v308
    %v373 = vunpack.c.l.b16 %v309
    %v374 = vunpack.c.l.b16 %v310
    %v375 = vunpack.c.l.b16 %v311
    %v376 = vunpack.c.l.b16 %v312
    %v377 = vunpack.c.l.b16 %v313
    %v378 = vpack.c.b16 %v371, %v370
    %v379 = vpack.c.b16 %v373, %v372
    %v380 = vpack.c.b16 %v375, %v374
    %v381 = vpack.c.b16 %v377, %v376
    %vm382 = vcmask 523264
    %v384 = vsel %vm382, %v378, 0
    %v387 = vsel %vm382, %v379, 0
    %v390 = vsel %vm382, %v380, 0
    %v393 = vsel %vm382, %v381, 0
    %395 = vmatpush.bf16.msra.mxu0 0
    %396 = vmatpush.bf16.msra.mxu0 0
    %397 = vmatpush.bf16.msra.mxu0 0
    %398 = vmatpush.bf16.msra.mxu0 0
    %399 = vmatpush.bf16.msra.mxu0 %v304
    %400 = vmatpush.bf16.msra.mxu0 %v302
    %401 = vmatpush.bf16.msra.mxu0 %v300
    %402 = vmatpush.bf16.msra.mxu0 %v298
    %403 = vmatmul.bf16.gmra.mxu0 %v384
    %v404 = vpop.f32.mrf.mxu0
    %v405 = vadd.f32 %v325, %v404
    %v406 = vpop.f32.mrf.mxu0
    %v407 = vadd.f32 %v330, %v406
    %408 = vmatmul.bf16.gmra.mxu0 %v387
    %v409 = vpop.f32.mrf.mxu0
    %v410 = vadd.f32 %v335, %v409
    %v411 = vpop.f32.mrf.mxu0
    %v412 = vadd.f32 %v340, %v411
    %413 = vmatmul.bf16.gmra.mxu0 %v390
    %v414 = vpop.f32.mrf.mxu0
    %v415 = vadd.f32 %v345, %v414
    %v416 = vpop.f32.mrf.mxu0
    %v417 = vadd.f32 %v350, %v416
    %418 = vmatmul.bf16.gmra.mxu0 %v393
    %v419 = vpop.f32.mrf.mxu0
    %v420 = vadd.f32 %v355, %v419
    %v421 = vpop.f32.mrf.mxu0
    %v422 = vadd.f32 %v360, %v421
    %423 = vdwg.mxu0
    %424 = vmatpush.bf16.msra.mxu0 0
    %425 = vmatpush.bf16.msra.mxu0 0
    %426 = vmatpush.bf16.msra.mxu0 0
    %427 = vmatpush.bf16.msra.mxu0 0
    %428 = vmatpush.bf16.msra.mxu0 %v305
    %429 = vmatpush.bf16.msra.mxu0 %v303
    %430 = vmatpush.bf16.msra.mxu0 %v301
    %431 = vmatpush.bf16.msra.mxu0 %v299
    %432 = vmatmul.bf16.gmra.mxu0 %v384
    %v433 = vpop.f32.mrf.mxu0
    %v434 = vadd.f32 %v325, %v433
    %v435 = vpop.f32.mrf.mxu0
    %v436 = vadd.f32 %v330, %v435
    %437 = vmatmul.bf16.gmra.mxu0 %v387
    %v438 = vpop.f32.mrf.mxu0
    %v439 = vadd.f32 %v335, %v438
    %v440 = vpop.f32.mrf.mxu0
    %v441 = vadd.f32 %v340, %v440
    %442 = vmatmul.bf16.gmra.mxu0 %v390
    %v443 = vpop.f32.mrf.mxu0
    %v444 = vadd.f32 %v345, %v443
    %v445 = vpop.f32.mrf.mxu0
    %v446 = vadd.f32 %v350, %v445
    %447 = vmatmul.bf16.gmra.mxu0 %v393
    %v448 = vpop.f32.mrf.mxu0
    %v449 = vadd.f32 %v355, %v448
    %v450 = vpop.f32.mrf.mxu0
    %v451 = vadd.f32 %v360, %v450
    %452 = vdwg.mxu0
    %v453 = vmax.f32 %v405, 0.0
    %v454 = vmax.f32 %v434, 0.0
    %v455 = vmax.f32 %v407, 0.0
    %v456 = vmax.f32 %v436, 0.0
    %v457 = vmax.f32 %v410, 0.0
    %v458 = vmax.f32 %v439, 0.0
    %v459 = vmax.f32 %v412, 0.0
    %v460 = vmax.f32 %v441, 0.0
    %v461 = vmax.f32 %v415, 0.0
    %v462 = vmax.f32 %v444, 0.0
    %v463 = vmax.f32 %v417, 0.0
    %v464 = vmax.f32 %v446, 0.0
    %v465 = vmax.f32 %v420, 0.0
    %v466 = vmax.f32 %v449, 0.0
    %v467 = vmax.f32 %v422, 0.0
    %v468 = vmax.f32 %v451, 0.0
    %v469 = vpack.c.bf16 %v455, %v453
    %v470 = vpack.c.bf16 %v456, %v454
    %v471 = vpack.c.bf16 %v459, %v457
    %v472 = vpack.c.bf16 %v460, %v458
    %v473 = vpack.c.bf16 %v463, %v461
    %v474 = vpack.c.bf16 %v464, %v462
    %v475 = vpack.c.bf16 %v467, %v465
    %v476 = vpack.c.bf16 %v468, %v466
    %v477 = vld [vmem:[%s7] sm:$0x3]
    %v478 = vld [vmem:[%s8] sm:$0xf]
    %480 = vset.pattern.permute.xlu0 0
    %481 = vperm.xlu0 %480, %v478
    %v482 = vpop.permute.xlu0 %481
    %v485 = vsel %vm382, %v477, 0
    %487 = vmatpush.bf16.msra.mxu0 0
    %488 = vmatpush.bf16.msra.mxu0 0
    %489 = vmatpush.bf16.msra.mxu0 0
    %490 = vmatpush.bf16.msra.mxu0 0
    %491 = vmatpush.bf16.msra.mxu0 %v475
    %492 = vmatpush.bf16.msra.mxu0 %v473
    %493 = vmatpush.bf16.msra.mxu0 %v471
    %494 = vmatpush.bf16.msra.mxu0 %v469
    %495 = vmatmul.bf16.gmra.mxu0 %v485
    %v496 = vpop.f32.mrf.mxu0
    %v497 = vadd.f32 %v482, %v496
    %v498 = vpop.f32.mrf.mxu0
    %499 = vdwg.mxu0
    %500 = vmatpush.bf16.msra.mxu0 0
    %501 = vmatpush.bf16.msra.mxu0 0
    %502 = vmatpush.bf16.msra.mxu0 0
    %503 = vmatpush.bf16.msra.mxu0 0
    %504 = vmatpush.bf16.msra.mxu0 %v476
    %505 = vmatpush.bf16.msra.mxu0 %v474
    %506 = vmatpush.bf16.msra.mxu0 %v472
    %507 = vmatpush.bf16.msra.mxu0 %v470
    %508 = vmatmul.bf16.gmra.mxu0 %v485
    %v509 = vpop.f32.mrf.mxu0
    %v510 = vadd.f32 %v482, %v509
    %v511 = vpop.f32.mrf.mxu0
    %512 = vdwg.mxu0
    %v513 = vtanh.pop %v497
    %v514 = vtanh.pop %v510
    %v517 = vrot.slane %v514, 4
    %vm518 = vcmask 1043456
    %v519 = vsel %vm518, %v513, %v517
    %521 = vst [vmem:[#allocation2] sm:$0xff] %v519
    // Predicated region
    $region38: #{tpu_custom_call.1} parent=1 // pred_check
      _
    $region39: #{tpu_custom_call.1} parent=1 // pred_check_branch
      %523 = sbr.rel (0) target = $region41
    $region40: #{tpu_custom_call.1} parent=1 // pred_region
      %525 = vsyncadd [#allocation3], 0
      %s527 = sshll.u32 [#allocation2], 4
      %s528 = int_to_ptr.vmem [resolvable:$true] %s527
      %s529 = sshll.u32 %s9, 4
      %s530 = int_to_ptr.hbm [resolvable:$true] %s529
      %532 = dma.vmem_to_hbm [thread:$0]  %s528, 128, %s530, [#allocation3]
    $region41: #{tpu_custom_call.1} parent=1 // pred_fallthru
      _
    // Predicated region
    $region42: #{tpu_custom_call.1} parent=1 // pred_check
      _
    $region43: #{tpu_custom_call.1} parent=1 // pred_check_branch
      %534 = sbr.rel (0) target = $region45
    $region44: #{tpu_custom_call.1} parent=1 // pred_region
      %536 = dma.done [#allocation3], 128
    $region45: #{tpu_custom_call.1} parent=1 // pred_fallthru
      _
    %537 = vsyncpa [#allocation3], 1

</llo_original>
